<compile_context>
chip_gen: v7x
topology: tpu7x:2x2x1
jax: 0.10.0
libtpu: 0.0.40
codegen_flags: <defaults>
</compile_context>

<pallas_src>
import jax
import jax.numpy as jnp
from jax import lax
from jax.experimental import pallas as pl
from jax.experimental.pallas import tpu as pltpu

LANES = 128
DEFAULT_MAX_BLOCK_ROWS = 2048  # 2048*128*4B = 1 MiB per f32 input block


def _make_silog_kernel(rows: int, block_rows: int, steps: int, needs_mask: bool):
    """Kernel computing per-split partial sums of log_diff and log_diff^2."""

    def kernel(p_ref, g_ref, sum_ref, sumsq_ref):
        j = pl.program_id(1)  # reduction (arbitrary) axis

        @pl.when(j == 0)
        def _init():
            sum_ref[...] = jnp.zeros_like(sum_ref)
            sumsq_ref[...] = jnp.zeros_like(sumsq_ref)

        p = p_ref[...].astype(jnp.float32)
        g = g_ref[...].astype(jnp.float32)
        # log(pred * ratio) - log(gt * ratio) == log(pred) - log(gt)
        d = jnp.log(p) - jnp.log(g)

        if needs_mask:  # static: only when the grid over-covers the rows
            s = pl.program_id(0)
            row0 = (s * steps + j) * block_rows
            local = lax.broadcasted_iota(jnp.int32, d.shape, 0)
            d = jnp.where(row0 + local < rows, d, 0.0)

        # Sublane reduce per step (VPU adds + one small XLU collapse); the
        # cross-lane reduction happens once, in the wrapper.
        sum_ref[0:1, :] += jnp.sum(d, axis=0, keepdims=True)
        sumsq_ref[0:1, :] += jnp.sum(d * d, axis=0, keepdims=True)

    return kernel


def silog_loss_pallas(pred, gt, ratio=10, ratio2=0.85,
                      max_block_rows=DEFAULT_MAX_BLOCK_ROWS):
    """Computes SilogLoss.forward(pred, gt). Returns a scalar (f32)."""
    assert pred.shape == gt.shape
    n_valid = pred.size
    flat_p = pred.reshape(-1)
    flat_g = gt.reshape(-1)

    # Only if numel is not a multiple of 128 lanes do we pad (value 1.0 gives
    # log_diff == 0, and we divide by n_valid, so padding never perturbs the
    # result). The common depth-map case takes the copy-free path.
    lane_pad = (-n_valid) % LANES
    if lane_pad:
        flat_p = jnp.concatenate([flat_p, jnp.ones((lane_pad,), flat_p.dtype)])
        flat_g = jnp.concatenate([flat_g, jnp.ones((lane_pad,), flat_g.dtype)])

    rows = flat_p.size // LANES
    p2d = flat_p.reshape(rows, LANES)
    g2d = flat_g.reshape(rows, LANES)

    block_rows = min(int(max_block_rows), rows)
    total_blocks = pl.cdiv(rows, block_rows)
    nsplit = 2 if total_blocks >= 2 else 1        # 2 TCs on v7x; serial elsewhere
    steps = pl.cdiv(total_blocks, nsplit)
    needs_mask = (nsplit * steps * block_rows) != rows

    kernel = _make_silog_kernel(rows, block_rows, steps, needs_mask)

    def in_index_map(s, j):
        # Clamp so the DMA never starts a whole block past the array; any
        # duplicated/out-of-range block is fully zeroed by the in-kernel mask.
        return (jnp.minimum(s * steps + j, total_blocks - 1), 0)

    out_index_map = lambda s, j: (s, 0)  # one resident (8,128) block per split

    psum, psumsq = pl.pallas_call(
        kernel,
        out_shape=(
            jax.ShapeDtypeStruct((nsplit * 8, LANES), jnp.float32),
            jax.ShapeDtypeStruct((nsplit * 8, LANES), jnp.float32),
        ),
        grid_spec=pltpu.PrefetchScalarGridSpec(
            num_scalar_prefetch=0,
            grid=(nsplit, steps),
            in_specs=[
                pl.BlockSpec((block_rows, LANES), in_index_map),
                pl.BlockSpec((block_rows, LANES), in_index_map),
            ],
            out_specs=[
                pl.BlockSpec((8, LANES), out_index_map),
                pl.BlockSpec((8, LANES), out_index_map),
            ],
        ),
        compiler_params=pltpu.CompilerParams(
            dimension_semantics=("parallel", "arbitrary"),
        ),
    )(p2d, g2d)

    inv_n = 1.0 / float(n_valid)
    mean_d = jnp.sum(psum) * inv_n
    mean_d2 = jnp.sum(psumsq) * inv_n
    # max(., 0): cheap insurance against fp cancellation when log_diff is
    # near-constant (mathematically the argument is >= (1 - ratio2) * Var >= 0).
    arg = jnp.maximum(mean_d2 - float(ratio2) * mean_d * mean_d, 0.0)
    return jnp.sqrt(arg) * float(ratio)


def silog_loss_ref(pred, gt, ratio=10, ratio2=0.85):
    log_diff = jnp.log(pred * ratio) - jnp.log(gt * ratio)
    silog1 = jnp.mean(log_diff ** 2)
    silog2 = ratio2 * jnp.mean(log_diff) ** 2
    return jnp.sqrt(silog1 - silog2) * ratio


if __name__ == "__main__":
    key = jax.random.PRNGKey(0)
    # (shape, max_block_rows override) — small shapes that exercise:
    #   single full block / ragged block tail mask / clamped duplicate block
    #   across the 2-way split / lane-ragged (numel % 128 != 0) fallback.
    cases = [
        ((2, 1, 16, 16), DEFAULT_MAX_BLOCK_ROWS),
        ((2, 1, 36, 16), 8),
        ((2, 1, 36, 16), 4),
        ((2, 1, 20, 19), DEFAULT_MAX_BLOCK_ROWS),
    ]
    for idx, (shape, mbr) in enumerate(cases):
        k1, k2 = jax.random.split(jax.random.fold_in(key, idx))
        pred = jax.random.uniform(k1, shape, jnp.float32, minval=0.5, maxval=10.0)
        gt = jax.random.uniform(k2, shape, jnp.float32, minval=0.5, maxval=10.0)

        loss = jax.block_until_ready(silog_loss_pallas(pred, gt, max_block_rows=mbr))
        ref = silog_loss_ref(pred, gt)
        assert jnp.allclose(loss, ref, rtol=1e-5, atol=1e-5), (shape, mbr, loss, ref)

    print("KERNEL_OK")
</pallas_src>

<mosaic_0001>
module attributes {stable_mosaic.version = 11 : i64} {
  func.func @kernel(%arg0: i32, %arg1: i32, %arg2: memref<4x128xf32, #tpu.memory_space<vmem>>, %arg3: memref<4x128xf32, #tpu.memory_space<vmem>>, %arg4: memref<8x128xf32, #tpu.memory_space<vmem>>, %arg5: memref<8x128xf32, #tpu.memory_space<vmem>>) attributes {dimension_semantics = [#tpu.dimension_semantics<parallel>, #tpu.dimension_semantics<arbitrary>], iteration_bounds = array<i64: 1, 1>, scalar_prefetch = 0 : i64, scratch_operands = 0 : i64, tpu.core_type = #tpu.core_type<tc>, window_params = [{transform_indices = @transform_0, window_bounds = array<i64: 4, 128>}, {transform_indices = @transform_1, window_bounds = array<i64: 4, 128>}, {transform_indices = @transform_2, window_bounds = array<i64: 8, 128>}, {transform_indices = @transform_3, window_bounds = array<i64: 8, 128>}]} {
    %c0_i32 = arith.constant 0 : i32
    %0 = arith.cmpi eq, %arg1, %c0_i32 : i32
    %1 = arith.extui %0 : i1 to i32
    %c0_i32_0 = arith.constant 0 : i32
    %2 = arith.cmpi ne, %1, %c0_i32_0 : i32
    scf.if %2 {
      %cst_13 = arith.constant 0.000000e+00 : f32
      %19 = vector.broadcast %cst_13 : f32 to vector<8x128xf32>
      %c0_14 = arith.constant 0 : index
      %c0_15 = arith.constant 0 : index
      %20 = vector.load %arg4[%c0_14, %c0_15] : memref<8x128xf32, #tpu.memory_space<vmem>>, vector<8x128xf32>
      tpu.vector_store %arg4[%c0_14, %c0_15], %19 {strides = array<i32>} : memref<8x128xf32, #tpu.memory_space<vmem>>, vector<8x128xf32>,
      %cst_16 = arith.constant 0.000000e+00 : f32
      %21 = vector.broadcast %cst_16 : f32 to vector<8x128xf32>
      %c0_17 = arith.constant 0 : index
      %c0_18 = arith.constant 0 : index
      %22 = vector.load %arg5[%c0_17, %c0_18] : memref<8x128xf32, #tpu.memory_space<vmem>>, vector<8x128xf32>
      tpu.vector_store %arg5[%c0_17, %c0_18], %21 {strides = array<i32>} : memref<8x128xf32, #tpu.memory_space<vmem>>, vector<8x128xf32>,
    } else {
    }
    %c0 = arith.constant 0 : index
    %c0_1 = arith.constant 0 : index
    %3 = vector.load %arg2[%c0, %c0_1] : memref<4x128xf32, #tpu.memory_space<vmem>>, vector<4x128xf32>
    %c0_2 = arith.constant 0 : index
    %c0_3 = arith.constant 0 : index
    %4 = vector.load %arg3[%c0_2, %c0_3] : memref<4x128xf32, #tpu.memory_space<vmem>>, vector<4x128xf32>
    %5 = math.log %3 : vector<4x128xf32>
    %6 = math.log %4 : vector<4x128xf32>
    %7 = arith.subf %5, %6 : vector<4x128xf32>
    %c0_4 = arith.constant 0 : index
    %c0_5 = arith.constant 0 : index
    %8 = vector.load %arg4[%c0_4, %c0_5] : memref<8x128xf32, #tpu.memory_space<vmem>>, vector<1x128xf32>
    %cst = arith.constant dense<0.000000e+00> : vector<128xf32>
    %9 = vector.multi_reduction <add>, %7, %cst [0] : vector<4x128xf32> to vector<128xf32>
    %10 = vector.shape_cast %9 : vector<128xf32> to vector<1x128xf32>
    %11 = arith.addf %8, %10 : vector<1x128xf32>
    %c0_6 = arith.constant 0 : index
    %c0_7 = arith.constant 0 : index
    %12 = vector.load %arg4[%c0_6, %c0_7] : memref<8x128xf32, #tpu.memory_space<vmem>>, vector<1x128xf32>
    tpu.vector_store %arg4[%c0_6, %c0_7], %11 {strides = array<i32>} : memref<8x128xf32, #tpu.memory_space<vmem>>, vector<1x128xf32>,
    %c0_8 = arith.constant 0 : index
    %c0_9 = arith.constant 0 : index
    %13 = vector.load %arg5[%c0_8, %c0_9] : memref<8x128xf32, #tpu.memory_space<vmem>>, vector<1x128xf32>
    %14 = arith.mulf %7, %7 : vector<4x128xf32>
    %cst_10 = arith.constant dense<0.000000e+00> : vector<128xf32>
    %15 = vector.multi_reduction <add>, %14, %cst_10 [0] : vector<4x128xf32> to vector<128xf32>
    %16 = vector.shape_cast %15 : vector<128xf32> to vector<1x128xf32>
    %17 = arith.addf %13, %16 : vector<1x128xf32>
    %c0_11 = arith.constant 0 : index
    %c0_12 = arith.constant 0 : index
    %18 = vector.load %arg5[%c0_11, %c0_12] : memref<8x128xf32, #tpu.memory_space<vmem>>, vector<1x128xf32>
    tpu.vector_store %arg5[%c0_11, %c0_12], %17 {strides = array<i32>} : memref<8x128xf32, #tpu.memory_space<vmem>>, vector<1x128xf32>,
    return
  }
  func.func @transform_0(%arg0: i32, %arg1: i32) -> (i32, i32) {
    %c1_i32 = arith.constant 1 : i32
    %0 = arith.muli %arg0, %c1_i32 : i32
    %1 = arith.addi %0, %arg1 : i32
    %c0_i32 = arith.constant 0 : i32
    %2 = arith.minsi %1, %c0_i32 : i32
    %c0_i32_0 = arith.constant 0 : i32
    %c0_i32_1 = arith.constant 0 : i32
    return %2, %c0_i32_0 : i32, i32
  }
  func.func @transform_1(%arg0: i32, %arg1: i32) -> (i32, i32) {
    %c1_i32 = arith.constant 1 : i32
    %0 = arith.muli %arg0, %c1_i32 : i32
    %1 = arith.addi %0, %arg1 : i32
    %c0_i32 = arith.constant 0 : i32
    %2 = arith.minsi %1, %c0_i32 : i32
    %c0_i32_0 = arith.constant 0 : i32
    %c0_i32_1 = arith.constant 0 : i32
    return %2, %c0_i32_0 : i32, i32
  }
  func.func @transform_2(%arg0: i32, %arg1: i32) -> (i32, i32) {
    %c0_i32 = arith.constant 0 : i32
    %c0_i32_0 = arith.constant 0 : i32
    return %arg0, %c0_i32 : i32, i32
  }
  func.func @transform_3(%arg0: i32, %arg1: i32) -> (i32, i32) {
    %c0_i32 = arith.constant 0 : i32
    %c0_i32_0 = arith.constant 0 : i32
    return %arg0, %c0_i32 : i32, i32
  }
}

</mosaic_0001>

<llo_original>
// kernel: tpu_custom_call.1
$region0: #{tpu_custom_call.1}
  #allocation0 [shape = 'u32[]', space=smem, size = 0x4, offset = 0x4, fixed_abs, tag = 'smem constant byte address 0x4 - core index']
  #allocation1 [shape = 'u32[144,128]{1,0:T(1,128)}', space=vmem, size = 0x12000, scoped, tag = 'internal scratch']
  %s0 = inlined_call_operand.hbm [shape: f32[4,128], index: 0, kind: input, shape index: {}]
  %s1 = inlined_call_operand.hbm [shape: f32[4,128], index: 1, kind: input, shape index: {}]
  %s2 = inlined_call_operand.hbm [shape: f32[8,128], index: 2, kind: output, shape index: {0}]
  %s3 = inlined_call_operand.hbm [shape: f32[8,128], index: 3, kind: output, shape index: {1}]
  %4 = xla_tuple %s2, %s3
  %s5 = sld [smem:[#allocation0]]
  $region38: #{tpu_custom_call.1} parent=0
    _
  %s7 = ssub.s32 1, %s5
  %s8 = scalar_select 0, %s7, %s5
  $region1: #{tpu_custom_call.1} parent=0
    #allocation2 [shape = 'u8[2048]{0}', space=vmem, size = 0x800, scoped, tag = 'input window, operand 0, single buffered']
    #allocation3 [shape = 's32[1]{0}', space=sflag, size = 0x4, scoped, tag = 'scoped memory for tpu_custom_call.1']
    #allocation4 [shape = 's32[1]{0}', space=sflag, size = 0x4, scoped, tag = 'scoped memory for tpu_custom_call.1']
    #allocation5 [shape = 'u8[2048]{0}', space=vmem, size = 0x800, scoped, tag = 'input window, operand 1, single buffered']
    #allocation6 [shape = 's32[1]{0}', space=sflag, size = 0x4, scoped, tag = 'scoped memory for tpu_custom_call.1']
    #allocation7 [shape = 'u8[4096]{0}', space=vmem, size = 0x1000, scoped, tag = 'output window, operand 0, single buffered']
    #allocation8 [shape = 'u8[4096]{0}', space=vmem, size = 0x1000, scoped, tag = 'output window, operand 1, single buffered']
    #allocation9 [shape = 's32[1]{0}', space=sflag, size = 0x4, scoped, tag = 'scoped memory for tpu_custom_call.1']
    %9 = vsyncpa [#allocation3], 0
    %10 = vsyncpa [#allocation6], 0
    %11 = vsyncpa [#allocation4], 0
    %12 = vsyncpa [#allocation9], 0
    // Predicated region
    $region2: #{tpu_custom_call.1} parent=1 // pred_check
      _
    $region3: #{tpu_custom_call.1} parent=1 // pred_check_branch
      %14 = sbr.rel (0) target = $region5
    $region4: #{tpu_custom_call.1} parent=1 // pred_region
      %s15 = sadd.s32 0, 0
      %p16 = scmp.lt.s32.totalorder %s15, 0
      %s17 = scalar_select %p16, %s15, 0
      %s19 = ssub.s32 64, 64
      %20 = vsyncadd [#allocation3], %s19
      %s21 = smul.addr %s17, 64
      %s22 = scalar_lea.hbm %s0, %s21
      %s24 = sshll.u32 [#allocation2], 4
      %s25 = int_to_ptr.vmem [resolvable:$true] %s24
      %27 = dma.hbm_to_vmem [thread:$0]  %s22, 64, %s25, [#allocation3]
    $region5: #{tpu_custom_call.1} parent=1 // pred_fallthru
      _
    // Predicated region
    $region6: #{tpu_custom_call.1} parent=1 // pred_check
      _
    $region7: #{tpu_custom_call.1} parent=1 // pred_check_branch
      %29 = sbr.rel (0) target = $region9
    $region8: #{tpu_custom_call.1} parent=1 // pred_region
      %s30 = sadd.s32 0, 0
      %p31 = scmp.lt.s32.totalorder %s30, 0
      %s32 = scalar_select %p31, %s30, 0
      %s34 = ssub.s32 64, 64
      %35 = vsyncadd [#allocation6], %s34
      %s36 = smul.addr %s32, 64
      %s37 = scalar_lea.hbm %s1, %s36
      %s39 = sshll.u32 [#allocation5], 4
      %s40 = int_to_ptr.vmem [resolvable:$true] %s39
      %42 = dma.hbm_to_vmem [thread:$0]  %s37, 64, %s40, [#allocation6]
    $region9: #{tpu_custom_call.1} parent=1 // pred_fallthru
      _
    // Predicated region
    $region10: #{tpu_custom_call.1} parent=1 // pred_check
      _
    $region11: #{tpu_custom_call.1} parent=1 // pred_check_branch
      %44 = sbr.rel (0) target = $region13
    $region12: #{tpu_custom_call.1} parent=1 // pred_region
      %45 = dma.done [#allocation3], 64
    $region13: #{tpu_custom_call.1} parent=1 // pred_fallthru
      _
    // Predicated region
    $region14: #{tpu_custom_call.1} parent=1 // pred_check
      _
    $region15: #{tpu_custom_call.1} parent=1 // pred_check_branch
      %47 = sbr.rel (0) target = $region17
    $region16: #{tpu_custom_call.1} parent=1 // pred_region
      %48 = dma.done [#allocation6], 64
    $region17: #{tpu_custom_call.1} parent=1 // pred_fallthru
      _
    %s49 = sadd.s32 0, 0
    %p50 = scmp.lt.s32.totalorder %s49, 0
    %s51 = scalar_select %p50, %s49, 0
    %s52 = sadd.s32 0, 0
    %p53 = scmp.lt.s32.totalorder %s52, 0
    %s54 = scalar_select %p53, %s52, 0
    %p55 = scmp.eq.s32.totalorder 0, 0
    // Predicated region
    $region18: #{tpu_custom_call.1} parent=1 // pred_check
      %p56 = pneg %p55
    $region19: #{tpu_custom_call.1} parent=1 // pred_check_branch
      %58 = sbr.rel (%p56) target = $region21
    $region20: #{tpu_custom_call.1} parent=1 // pred_region
      %59 = vst [vmem:[#allocation7] sm:$0xff] 0.0
      %60 = vst [vmem:[#allocation8] sm:$0xff] 0.0
    $region21: #{tpu_custom_call.1} parent=1 // pred_fallthru
      _
    %v61 = vld [vmem:[#allocation2] sm:$0xf]
    %v62 = vld [vmem:[#allocation5] sm:$0xf]
    %v63 = vlog2.pop %v61
    %v64 = vmul.f32 %v63, 0.6931472
    %v65 = vlog2.pop %v62
    %v66 = vmul.f32 %v65, 0.6931472
    %v67 = vsub.f32 %v64, %v66
    %v68 = vld [vmem:[#allocation7] sm:$0x1]
    %vm69 = vcmask 1043456
    %v70 = vsel %vm69, %v67, 0.0
    %v71 = vrot.slane %v70, 4
    %v72 = vadd.f32 %v70, %v71
    %v73 = vrot.slane %v72, 2
    %v74 = vadd.f32 %v72, %v73
    %v75 = vrot.slane %v74, 1
    %v76 = vadd.f32 %v74, %v75
    %v77 = vadd.f32 %v68, %v76
    %78 = vst [vmem:[#allocation7] sm:$0x1] %v77
    %v79 = vld [vmem:[#allocation8] sm:$0x1]
    %v80 = vmul.f32 %v67, %v67
    %v81 = vsel %vm69, %v80, 0.0
    %v82 = vrot.slane %v81, 4
    %v83 = vadd.f32 %v81, %v82
    %v84 = vrot.slane %v83, 2
    %v85 = vadd.f32 %v83, %v84
    %v86 = vrot.slane %v85, 1
    %v87 = vadd.f32 %v85, %v86
    %v88 = vadd.f32 %v79, %v87
    %89 = vst [vmem:[#allocation8] sm:$0x1] %v88
    // Predicated region
    $region22: #{tpu_custom_call.1} parent=1 // pred_check
      _
    $region23: #{tpu_custom_call.1} parent=1 // pred_check_branch
      %91 = sbr.rel (0) target = $region25
    $region24: #{tpu_custom_call.1} parent=1 // pred_region
      %s93 = ssub.s32 128, 128
      %94 = vsyncadd [#allocation4], %s93
      %s96 = sshll.u32 [#allocation7], 4
      %s97 = int_to_ptr.vmem [resolvable:$true] %s96
      %99 = dma.vmem_to_hbm [thread:$0]  %s97, 128, %s2, [#allocation4]
    $region25: #{tpu_custom_call.1} parent=1 // pred_fallthru
      _
    // Predicated region
    $region26: #{tpu_custom_call.1} parent=1 // pred_check
      _
    $region27: #{tpu_custom_call.1} parent=1 // pred_check_branch
      %101 = sbr.rel (0) target = $region29
    $region28: #{tpu_custom_call.1} parent=1 // pred_region
      %s103 = ssub.s32 128, 128
      %104 = vsyncadd [#allocation9], %s103
      %s106 = sshll.u32 [#allocation8], 4
      %s107 = int_to_ptr.vmem [resolvable:$true] %s106
      %109 = dma.vmem_to_hbm [thread:$0]  %s107, 128, %s3, [#allocation9]
    $region29: #{tpu_custom_call.1} parent=1 // pred_fallthru
      _
    // Predicated region
    $region30: #{tpu_custom_call.1} parent=1 // pred_check
      _
    $region31: #{tpu_custom_call.1} parent=1 // pred_check_branch
      %111 = sbr.rel (0) target = $region33
    $region32: #{tpu_custom_call.1} parent=1 // pred_region
      %112 = dma.done [#allocation4], 128
    $region33: #{tpu_custom_call.1} parent=1 // pred_fallthru
      _
    // Predicated region
    $region34: #{tpu_custom_call.1} parent=1 // pred_check
      _
    $region35: #{tpu_custom_call.1} parent=1 // pred_check_branch
      %114 = sbr.rel (0) target = $region37
    $region36: #{tpu_custom_call.1} parent=1 // pred_region
      %115 = dma.done [#allocation9], 128
    $region37: #{tpu_custom_call.1} parent=1 // pred_fallthru
      _
    %116 = vsyncpa [#allocation3], 1
    %117 = vsyncpa [#allocation6], 1
    %118 = vsyncpa [#allocation4], 1
    %119 = vsyncpa [#allocation9], 1

</llo_original>
